<compile_context>
chip_gen: v7x
topology: tpu7x:2x2x1
jax: 0.10.0
libtpu: 0.0.40
codegen_flags: <defaults>
</compile_context>

<pallas_src>
import jax
import jax.numpy as jnp
from jax.experimental import pallas as pl
from jax.experimental.pallas import tpu as pltpu

INPUT_DIM = 1536
HIDDEN_DIM = 128
OUTPUT_DIM = 1
OUT_PAD = 128  # lane-dense output slab width


def _round_up(x, m):
    return ((x + m - 1) // m) * m


def mlp_kernel(x_ref, w1_ref, b1_ref, w2_ref, b2_ref, o_ref):
    # fc1: (tb, in) @ (in, hidden) on the MXU, f32 accumulation.
    h = jnp.dot(x_ref[...], w1_ref[...], preferred_element_type=jnp.float32)
    h = jnp.maximum(h + b1_ref[...], 0.0)
    # fc2: hidden -> 1 as VPU mul + XLU lane reduce (avoid an N=1 MXU matmul).
    z = jnp.sum(h * w2_ref[...], axis=-1, keepdims=True) + b2_ref[...]
    p = jax.nn.sigmoid(z)
    # Lane-dense write: broadcast the single output column across 128 lanes so
    # stores are full, unmasked vst; the wrapper keeps only column 0.
    o_ref[...] = jnp.broadcast_to(p, o_ref.shape).astype(o_ref.dtype)


def mlp_forward(x, w1, b1, w2_row, b2, *, batch_tile=1024, use_bf16=False,
                vmem_limit_bytes=48 * 1024 * 1024):
    """x: (B, INPUT_DIM); w1: (INPUT_DIM, HIDDEN) [pre-transposed];
    b1: (1, HIDDEN); w2_row: (1, HIDDEN) (== PyTorch fc2.weight); b2: (1, 1)."""
    B, D = x.shape
    assert D == INPUT_DIM

    # Shrink the tile for small batches and pad remainders to a tile multiple.
    tile = min(batch_tile, _round_up(B, 8))
    Bp = _round_up(B, tile)
    if Bp != B:
        x = jnp.pad(x, ((0, Bp - B), (0, 0)))

    if use_bf16:
        # Halve HBM traffic on the mem-bound MXU operands; accumulation stays f32.
        x = x.astype(jnp.bfloat16)
        w1 = w1.astype(jnp.bfloat16)

    grid = (Bp // tile,)

    out_padded = pl.pallas_call(
        mlp_kernel,
        out_shape=jax.ShapeDtypeStruct((Bp, OUT_PAD), jnp.float32),
        grid_spec=pltpu.PrefetchScalarGridSpec(
            num_scalar_prefetch=0,
            grid=grid,
            in_specs=[
                pl.BlockSpec((tile, INPUT_DIM), lambda i: (i, 0)),        # x tile
                pl.BlockSpec((INPUT_DIM, HIDDEN_DIM), lambda i: (0, 0)),  # w1 (resident)
                pl.BlockSpec((1, HIDDEN_DIM), lambda i: (0, 0)),          # b1
                pl.BlockSpec((1, HIDDEN_DIM), lambda i: (0, 0)),          # w2 row
                pl.BlockSpec((1, 1), lambda i: (0, 0)),                   # b2
            ],
            out_specs=pl.BlockSpec((tile, OUT_PAD), lambda i: (i, 0)),
        ),
        compiler_params=pltpu.CompilerParams(
            dimension_semantics=("parallel",),
            vmem_limit_bytes=vmem_limit_bytes,
        ),
    )(x, w1, b1, w2_row, b2)

    # Undo batch padding and keep only the real output column.
    return out_padded[:B, :OUTPUT_DIM]


def init_params(key):
    # Deterministic init mimicking nn.Linear's uniform(-1/sqrt(fan_in), 1/sqrt(fan_in)).
    k1, k2, k3, k4 = jax.random.split(key, 4)
    bound1 = 1.0 / (INPUT_DIM ** 0.5)
    bound2 = 1.0 / (HIDDEN_DIM ** 0.5)
    # fc1 weight stored pre-transposed: [in, out]; fc2 weight kept as its natural (1, hidden) row.
    w1 = jax.random.uniform(k1, (INPUT_DIM, HIDDEN_DIM), jnp.float32, -bound1, bound1)
    b1 = jax.random.uniform(k2, (1, HIDDEN_DIM), jnp.float32, -bound1, bound1)
    w2_row = jax.random.uniform(k3, (1, HIDDEN_DIM), jnp.float32, -bound2, bound2)
    b2 = jax.random.uniform(k4, (1, OUTPUT_DIM), jnp.float32, -bound2, bound2)
    return w1, b1, w2_row, b2


def mlp_reference(x, w1, b1, w2_row, b2):
    h = jnp.maximum(x @ w1 + b1, 0.0)
    return jax.nn.sigmoid(h @ w2_row.T + b2)


if __name__ == "__main__":
    key = jax.random.PRNGKey(0)
    kx, kp = jax.random.split(key)
    w1, b1, w2_row, b2 = init_params(kp)

    # f32 path, divisible batch, tight tolerance.
    batch = 16
    x = jax.random.normal(kx, (batch, INPUT_DIM), jnp.float32)
    out = jax.block_until_ready(mlp_forward(x, w1, b1, w2_row, b2))
    ref = mlp_reference(x, w1, b1, w2_row, b2)
    assert out.shape == (batch, OUTPUT_DIM)
    assert jnp.allclose(out, ref, atol=1e-5, rtol=1e-5), "f32 mismatch vs reference"

    # Non-divisible batch (exercises padding) + bf16 inputs (mem-bound fast path).
    batch2 = 13
    x2 = x[:batch2]
    out2 = jax.block_until_ready(mlp_forward(x2, w1, b1, w2_row, b2, use_bf16=True))
    ref2 = mlp_reference(x2, w1, b1, w2_row, b2)
    assert out2.shape == (batch2, OUTPUT_DIM)
    assert jnp.allclose(out2, ref2, atol=3e-2, rtol=3e-2), "bf16 mismatch vs reference"

    print("KERNEL_OK")
</pallas_src>

<mosaic_0001>
module attributes {stable_mosaic.version = 11 : i64} {
  func.func @mlp_kernel(%arg0: i32, %arg1: memref<16x1536xf32, #tpu.memory_space<vmem>>, %arg2: memref<1536x128xf32, #tpu.memory_space<vmem>>, %arg3: memref<1x128xf32, #tpu.memory_space<vmem>>, %arg4: memref<1x128xf32, #tpu.memory_space<vmem>>, %arg5: memref<1x1xf32, #tpu.memory_space<vmem>>, %arg6: memref<16x128xf32, #tpu.memory_space<vmem>>) attributes {dimension_semantics = [#tpu.dimension_semantics<parallel>], iteration_bounds = array<i64: 1>, scalar_prefetch = 0 : i64, scratch_operands = 0 : i64, tpu.core_type = #tpu.core_type<tc>, window_params = [{transform_indices = @transform_0, window_bounds = array<i64: 16, 1536>}, {pipeline_mode = #tpu.pipeline_mode<synchronous>, transform_indices = @transform_1, window_bounds = array<i64: 1536, 128>}, {pipeline_mode = #tpu.pipeline_mode<synchronous>, transform_indices = @transform_2, window_bounds = array<i64: 1, 128>}, {pipeline_mode = #tpu.pipeline_mode<synchronous>, transform_indices = @transform_3, window_bounds = array<i64: 1, 128>}, {pipeline_mode = #tpu.pipeline_mode<synchronous>, transform_indices = @transform_4, window_bounds = array<i64: 1, 1>}, {transform_indices = @transform_5, window_bounds = array<i64: 16, 128>}]} {
    %c0 = arith.constant 0 : index
    %c0_0 = arith.constant 0 : index
    %0 = vector.load %arg1[%c0, %c0_0] : memref<16x1536xf32, #tpu.memory_space<vmem>>, vector<16x1536xf32>
    %c0_1 = arith.constant 0 : index
    %c0_2 = arith.constant 0 : index
    %1 = vector.load %arg2[%c0_1, %c0_2] : memref<1536x128xf32, #tpu.memory_space<vmem>>, vector<1536x128xf32>
    %cst = arith.constant dense<0.000000e+00> : vector<16x128xf32>
    %2 = tpu.matmul %0, %1, %cst {dimension_numbers = #tpu.dot_dimension_numbers<[1], [0], [0], [1], [0, 0, 1, 1], [], []>} : vector<16x1536xf32>, vector<1536x128xf32>, vector<16x128xf32> -> vector<16x128xf32>
    %c0_3 = arith.constant 0 : index
    %c0_4 = arith.constant 0 : index
    %3 = vector.load %arg3[%c0_3, %c0_4] : memref<1x128xf32, #tpu.memory_space<vmem>>, vector<1x128xf32>
    %4 = vector.broadcast %3 : vector<1x128xf32> to vector<16x128xf32>
    %5 = arith.addf %2, %4 : vector<16x128xf32>
    %cst_5 = arith.constant 0.000000e+00 : f32
    %6 = vector.broadcast %cst_5 : f32 to vector<16x128xf32>
    %7 = arith.maximumf %5, %6 : vector<16x128xf32>
    %c0_6 = arith.constant 0 : index
    %c0_7 = arith.constant 0 : index
    %8 = vector.load %arg4[%c0_6, %c0_7] : memref<1x128xf32, #tpu.memory_space<vmem>>, vector<1x128xf32>
    %9 = vector.broadcast %8 : vector<1x128xf32> to vector<16x128xf32>
    %10 = arith.mulf %7, %9 : vector<16x128xf32>
    %cst_8 = arith.constant dense<0.000000e+00> : vector<16xf32>
    %11 = vector.multi_reduction <add>, %10, %cst_8 [1] : vector<16x128xf32> to vector<16xf32>
    %12 = vector.shape_cast %11 : vector<16xf32> to vector<16x1xf32>
    %c0_9 = arith.constant 0 : index
    %c0_10 = arith.constant 0 : index
    %13 = vector.load %arg5[%c0_9, %c0_10] : memref<1x1xf32, #tpu.memory_space<vmem>>, vector<1x1xf32>
    %14 = vector.broadcast %13 : vector<1x1xf32> to vector<16x1xf32>
    %15 = arith.addf %12, %14 : vector<16x1xf32>
    %16 = arith.negf %15 : vector<16x1xf32>
    %17 = math.exp %16 : vector<16x1xf32>
    %cst_11 = arith.constant 1.000000e+00 : f32
    %18 = vector.broadcast %cst_11 : f32 to vector<16x1xf32>
    %19 = arith.addf %18, %17 : vector<16x1xf32>
    %20 = arith.divf %18, %19 : vector<16x1xf32>
    %21 = vector.shape_cast %20 : vector<16x1xf32> to vector<16x1xf32>
    %22 = vector.broadcast %21 : vector<16x1xf32> to vector<16x128xf32>
    %c0_12 = arith.constant 0 : index
    %c0_13 = arith.constant 0 : index
    %23 = vector.load %arg6[%c0_12, %c0_13] : memref<16x128xf32, #tpu.memory_space<vmem>>, vector<16x128xf32>
    tpu.vector_store %arg6[%c0_12, %c0_13], %22 {strides = array<i32>} : memref<16x128xf32, #tpu.memory_space<vmem>>, vector<16x128xf32>,
    return
  }
  func.func @transform_0(%arg0: i32) -> (i32, i32) {
    %c0_i32 = arith.constant 0 : i32
    %c0_i32_0 = arith.constant 0 : i32
    return %arg0, %c0_i32 : i32, i32
  }
  func.func @transform_1(%arg0: i32) -> (i32, i32) {
    %c0_i32 = arith.constant 0 : i32
    %c0_i32_0 = arith.constant 0 : i32
    %c0_i32_1 = arith.constant 0 : i32
    return %c0_i32, %c0_i32_0 : i32, i32
  }
  func.func @transform_2(%arg0: i32) -> (i32, i32) {
    %c0_i32 = arith.constant 0 : i32
    %c0_i32_0 = arith.constant 0 : i32
    %c0_i32_1 = arith.constant 0 : i32
    return %c0_i32, %c0_i32_0 : i32, i32
  }
  func.func @transform_3(%arg0: i32) -> (i32, i32) {
    %c0_i32 = arith.constant 0 : i32
    %c0_i32_0 = arith.constant 0 : i32
    %c0_i32_1 = arith.constant 0 : i32
    return %c0_i32, %c0_i32_0 : i32, i32
  }
  func.func @transform_4(%arg0: i32) -> (i32, i32) {
    %c0_i32 = arith.constant 0 : i32
    %c0_i32_0 = arith.constant 0 : i32
    %c0_i32_1 = arith.constant 0 : i32
    return %c0_i32, %c0_i32_0 : i32, i32
  }
  func.func @transform_5(%arg0: i32) -> (i32, i32) {
    %c0_i32 = arith.constant 0 : i32
    %c0_i32_0 = arith.constant 0 : i32
    return %arg0, %c0_i32 : i32, i32
  }
}

</mosaic_0001>

<llo_original>
// kernel: tpu_custom_call.1
$region0: #{tpu_custom_call.1}
  #allocation0 [shape = 'u32[]', space=smem, size = 0x4, offset = 0x4, fixed_abs, tag = 'smem constant byte address 0x4 - core index']
  #allocation1 [shape = 'u32[144,128]{1,0:T(1,128)}', space=vmem, size = 0x12000, scoped, tag = 'internal scratch']
  #allocation2 [shape = 'f32[1,1]{1,0:T(1,128)S(1)}', space=vmem, size = 0x200, scoped, tag = 'scoped memory for tpu_custom_call.1']
  %s0 = inlined_call_operand.hbm [shape: f32[16,1536], index: 0, kind: input, shape index: {}]
  %s1 = inlined_call_operand.hbm [shape: f32[1536,128], index: 1, kind: input, shape index: {}]
  %s2 = inlined_call_operand.vmem [shape: f32[1,128], index: 2, kind: input, shape index: {}]
  %s3 = inlined_call_operand.vmem [shape: f32[1,128], index: 3, kind: input, shape index: {}]
  %s4 = inlined_call_operand.<no memory space> [shape: f32[1,1], index: 4, kind: input, shape index: {}]
  %s5 = inlined_call_operand.hbm [shape: f32[16,128], index: 5, kind: output, shape index: {}]
  %s6 = sld [smem:[#allocation0]]
  $region38: #{tpu_custom_call.1} parent=0
    _
  %s8 = ssub.s32 1, %s6
  %s9 = scalar_select 0, %s8, %s6
  %v10 = vstv %s4
  %11 = vst [vmem:[#allocation2] sm:$0x1] %v10
  $region1: #{tpu_custom_call.1} parent=0
    #allocation3 [shape = 'u8[98304]{0}', space=vmem, size = 0x18000, scoped, tag = 'input window, operand 0, single buffered']
    #allocation4 [shape = 's32[1]{0}', space=sflag, size = 0x4, scoped, tag = 'scoped memory for tpu_custom_call.1']
    #allocation5 [shape = 's32[1]{0}', space=sflag, size = 0x4, scoped, tag = 'scoped memory for tpu_custom_call.1']
    #allocation6 [shape = 'u8[786432]{0}', space=vmem, size = 0xc0000, scoped, tag = 'input window, operand 1, single buffered']
    #allocation7 [shape = 's32[1]{0}', space=sflag, size = 0x4, scoped, tag = 'scoped memory for tpu_custom_call.1']
    #allocation8 [shape = 'u8[8192]{0}', space=vmem, size = 0x2000, scoped, tag = 'output window, operand 0, single buffered']
    %12 = vsyncpa [#allocation4], 0
    %13 = vsyncpa [#allocation7], 0
    %14 = vsyncpa [#allocation5], 0
    // Predicated region
    $region2: #{tpu_custom_call.1} parent=1 // pred_check
      _
    $region3: #{tpu_custom_call.1} parent=1 // pred_check_branch
      %16 = sbr.rel (0) target = $region5
    $region4: #{tpu_custom_call.1} parent=1 // pred_region
      %s18 = ssub.s32 3072, 3072
      %19 = vsyncadd [#allocation4], %s18
      %s20 = sshll.u32 [#allocation3], 4
      %s21 = int_to_ptr.vmem [resolvable:$true] %s20
      %26 = dma.hbm_to_vmem [thread:$0]  %s0, 3072, %s21, [#allocation4], 1536, 1536, 96
    $region5: #{tpu_custom_call.1} parent=1 // pred_fallthru
      _
    // Predicated region
    $region6: #{tpu_custom_call.1} parent=1 // pred_check
      _
    $region7: #{tpu_custom_call.1} parent=1 // pred_check_branch
      %28 = sbr.rel (0) target = $region9
    $region8: #{tpu_custom_call.1} parent=1 // pred_region
      %s30 = ssub.s32 24576, 24576
      %31 = vsyncadd [#allocation7], %s30
      %s32 = sshll.u32 [#allocation6], 4
      %s33 = int_to_ptr.vmem [resolvable:$true] %s32
      %38 = dma.hbm_to_vmem [thread:$0]  %s1, 24576, %s33, [#allocation7], 128, 128, 8
    $region9: #{tpu_custom_call.1} parent=1 // pred_fallthru
      _
    // Predicated region
    $region10: #{tpu_custom_call.1} parent=1 // pred_check
      _
    $region11: #{tpu_custom_call.1} parent=1 // pred_check_branch
      %40 = sbr.rel (0) target = $region13
    $region12: #{tpu_custom_call.1} parent=1 // pred_region
      _
    $region13: #{tpu_custom_call.1} parent=1 // pred_fallthru
      _
    // Predicated region
    $region14: #{tpu_custom_call.1} parent=1 // pred_check
      _
    $region15: #{tpu_custom_call.1} parent=1 // pred_check_branch
      %42 = sbr.rel (0) target = $region17
    $region16: #{tpu_custom_call.1} parent=1 // pred_region
      _
    $region17: #{tpu_custom_call.1} parent=1 // pred_fallthru
      _
    // Predicated region
    $region18: #{tpu_custom_call.1} parent=1 // pred_check
      _
    $region19: #{tpu_custom_call.1} parent=1 // pred_check_branch
      %44 = sbr.rel (0) target = $region21
    $region20: #{tpu_custom_call.1} parent=1 // pred_region
      _
    $region21: #{tpu_custom_call.1} parent=1 // pred_fallthru
      _
    // Predicated region
    $region22: #{tpu_custom_call.1} parent=1 // pred_check
      _
    $region23: #{tpu_custom_call.1} parent=1 // pred_check_branch
      %46 = sbr.rel (0) target = $region25
    $region24: #{tpu_custom_call.1} parent=1 // pred_region
      %47 = dma.done [#allocation4], 3072
    $region25: #{tpu_custom_call.1} parent=1 // pred_fallthru
      _
    // Predicated region
    $region26: #{tpu_custom_call.1} parent=1 // pred_check
      _
    $region27: #{tpu_custom_call.1} parent=1 // pred_check_branch
      %49 = sbr.rel (0) target = $region29
    $region28: #{tpu_custom_call.1} parent=1 // pred_region
      %50 = dma.done [#allocation7], 24576
    $region29: #{tpu_custom_call.1} parent=1 // pred_fallthru
      _
    %v51 = vld [vmem:[#allocation3] sm:$0xff]
    %v52 = vld [vmem:[#allocation3 + $0x8] sm:$0xff]
    %v53 = vld [vmem:[#allocation3 + $0x10] sm:$0xff]
    %v54 = vld [vmem:[#allocation3 + $0x18] sm:$0xff]
    %v55 = vld [vmem:[#allocation3 + $0x20] sm:$0xff]
    %v56 = vld [vmem:[#allocation3 + $0x28] sm:$0xff]
    %v57 = vld [vmem:[#allocation3 + $0x30] sm:$0xff]
    %v58 = vld [vmem:[#allocation3 + $0x38] sm:$0xff]
    %v59 = vld [vmem:[#allocation3 + $0x40] sm:$0xff]
    %v60 = vld [vmem:[#allocation3 + $0x48] sm:$0xff]
    %v61 = vld [vmem:[#allocation3 + $0x50] sm:$0xff]
    %v62 = vld [vmem:[#allocation3 + $0x58] sm:$0xff]
    %v63 = vld [vmem:[#allocation3 + $0x60] sm:$0xff]
    %v64 = vld [vmem:[#allocation3 + $0x68] sm:$0xff]
    %v65 = vld [vmem:[#allocation3 + $0x70] sm:$0xff]
    %v66 = vld [vmem:[#allocation3 + $0x78] sm:$0xff]
    %v67 = vld [vmem:[#allocation3 + $0x80] sm:$0xff]
    %v68 = vld [vmem:[#allocation3 + $0x88] sm:$0xff]
    %v69 = vld [vmem:[#allocation3 + $0x90] sm:$0xff]
    %v70 = vld [vmem:[#allocation3 + $0x98] sm:$0xff]
    %v71 = vld [vmem:[#allocation3 + $0xa0] sm:$0xff]
    %v72 = vld [vmem:[#allocation3 + $0xa8] sm:$0xff]
    %v73 = vld [vmem:[#allocation3 + $0xb0] sm:$0xff]
    %v74 = vld [vmem:[#allocation3 + $0xb8] sm:$0xff]
    %v75 = vld [vmem:[#allocation6] sm:$0xff]
    %v76 = vld [vmem:[#allocation6 + $0x8] sm:$0xff]
    %v77 = vld [vmem:[#allocation6 + $0x10] sm:$0xff]
    %v78 = vld [vmem:[#allocation6 + $0x18] sm:$0xff]
    %v79 = vld [vmem:[#allocation6 + $0x20] sm:$0xff]
    %v80 = vld [vmem:[#allocation6 + $0x28] sm:$0xff]
    %v81 = vld [vmem:[#allocation6 + $0x30] sm:$0xff]
    %v82 = vld [vmem:[#allocation6 + $0x38] sm:$0xff]
    %v83 = vld [vmem:[#allocation6 + $0x40] sm:$0xff]
    %v84 = vld [vmem:[#allocation6 + $0x48] sm:$0xff]
    %v85 = vld [vmem:[#allocation6 + $0x50] sm:$0xff]
    %v86 = vld [vmem:[#allocation6 + $0x58] sm:$0xff]
    %v87 = vld [vmem:[#allocation6 + $0x60] sm:$0xff]
    %v88 = vld [vmem:[#allocation6 + $0x68] sm:$0xff]
    %v89 = vld [vmem:[#allocation6 + $0x70] sm:$0xff]
    %v90 = vld [vmem:[#allocation6 + $0x78] sm:$0xff]
    %v91 = vld [vmem:[#allocation6 + $0x80] sm:$0xff]
    %v92 = vld [vmem:[#allocation6 + $0x88] sm:$0xff]
    %v93 = vld [vmem:[#allocation6 + $0x90] sm:$0xff]
    %v94 = vld [vmem:[#allocation6 + $0x98] sm:$0xff]
    %v95 = vld [vmem:[#allocation6 + $0xa0] sm:$0xff]
    %v96 = vld [vmem:[#allocation6 + $0xa8] sm:$0xff]
    %v97 = vld [vmem:[#allocation6 + $0xb0] sm:$0xff]
    %v98 = vld [vmem:[#allocation6 + $0xb8] sm:$0xff]
    %v99 = vld [vmem:[#allocation6 + $0xc0] sm:$0xff]
    %v100 = vld [vmem:[#allocation6 + $0xc8] sm:$0xff]
    %v101 = vld [vmem:[#allocation6 + $0xd0] sm:$0xff]
    %v102 = vld [vmem:[#allocation6 + $0xd8] sm:$0xff]
    %v103 = vld [vmem:[#allocation6 + $0xe0] sm:$0xff]
    %v104 = vld [vmem:[#allocation6 + $0xe8] sm:$0xff]
    %v105 = vld [vmem:[#allocation6 + $0xf0] sm:$0xff]
    %v106 = vld [vmem:[#allocation6 + $0xf8] sm:$0xff]
    %v107 = vld [vmem:[#allocation6 + $0x100] sm:$0xff]
    %v108 = vld [vmem:[#allocation6 + $0x108] sm:$0xff]
    %v109 = vld [vmem:[#allocation6 + $0x110] sm:$0xff]
    %v110 = vld [vmem:[#allocation6 + $0x118] sm:$0xff]
    %v111 = vld [vmem:[#allocation6 + $0x120] sm:$0xff]
    %v112 = vld [vmem:[#allocation6 + $0x128] sm:$0xff]
    %v113 = vld [vmem:[#allocation6 + $0x130] sm:$0xff]
    %v114 = vld [vmem:[#allocation6 + $0x138] sm:$0xff]
    %v115 = vld [vmem:[#allocation6 + $0x140] sm:$0xff]
    %v116 = vld [vmem:[#allocation6 + $0x148] sm:$0xff]
    %v117 = vld [vmem:[#allocation6 + $0x150] sm:$0xff]
    %v118 = vld [vmem:[#allocation6 + $0x158] sm:$0xff]
    %v119 = vld [vmem:[#allocation6 + $0x160] sm:$0xff]
    %v120 = vld [vmem:[#allocation6 + $0x168] sm:$0xff]
    %v121 = vld [vmem:[#allocation6 + $0x170] sm:$0xff]
    %v122 = vld [vmem:[#allocation6 + $0x178] sm:$0xff]
    %v123 = vld [vmem:[#allocation6 + $0x180] sm:$0xff]
    %v124 = vld [vmem:[#allocation6 + $0x188] sm:$0xff]
    %v125 = vld [vmem:[#allocation6 + $0x190] sm:$0xff]
    %v126 = vld [vmem:[#allocation6 + $0x198] sm:$0xff]
    %v127 = vld [vmem:[#allocation6 + $0x1a0] sm:$0xff]
    %v128 = vld [vmem:[#allocation6 + $0x1a8] sm:$0xff]
    %v129 = vld [vmem:[#allocation6 + $0x1b0] sm:$0xff]
    %v130 = vld [vmem:[#allocation6 + $0x1b8] sm:$0xff]
    %v131 = vld [vmem:[#allocation6 + $0x1c0] sm:$0xff]
    %v132 = vld [vmem:[#allocation6 + $0x1c8] sm:$0xff]
    %v133 = vld [vmem:[#allocation6 + $0x1d0] sm:$0xff]
    %v134 = vld [vmem:[#allocation6 + $0x1d8] sm:$0xff]
    %v135 = vld [vmem:[#allocation6 + $0x1e0] sm:$0xff]
    %v136 = vld [vmem:[#allocation6 + $0x1e8] sm:$0xff]
    %v137 = vld [vmem:[#allocation6 + $0x1f0] sm:$0xff]
    %v138 = vld [vmem:[#allocation6 + $0x1f8] sm:$0xff]
    %v139 = vld [vmem:[#allocation6 + $0x200] sm:$0xff]
    %v140 = vld [vmem:[#allocation6 + $0x208] sm:$0xff]
    %v141 = vld [vmem:[#allocation6 + $0x210] sm:$0xff]
    %v142 = vld [vmem:[#allocation6 + $0x218] sm:$0xff]
    %v143 = vld [vmem:[#allocation6 + $0x220] sm:$0xff]
    %v144 = vld [vmem:[#allocation6 + $0x228] sm:$0xff]
    %v145 = vld [vmem:[#allocation6 + $0x230] sm:$0xff]
    %v146 = vld [vmem:[#allocation6 + $0x238] sm:$0xff]
    %v147 = vld [vmem:[#allocation6 + $0x240] sm:$0xff]
    %v148 = vld [vmem:[#allocation6 + $0x248] sm:$0xff]
    %v149 = vld [vmem:[#allocation6 + $0x250] sm:$0xff]
    %v150 = vld [vmem:[#allocation6 + $0x258] sm:$0xff]
    %v151 = vld [vmem:[#allocation6 + $0x260] sm:$0xff]
    %v152 = vld [vmem:[#allocation6 + $0x268] sm:$0xff]
    %v153 = vld [vmem:[#allocation6 + $0x270] sm:$0xff]
    %v154 = vld [vmem:[#allocation6 + $0x278] sm:$0xff]
    %v155 = vld [vmem:[#allocation6 + $0x280] sm:$0xff]
    %v156 = vld [vmem:[#allocation6 + $0x288] sm:$0xff]
    %v157 = vld [vmem:[#allocation6 + $0x290] sm:$0xff]
    %v158 = vld [vmem:[#allocation6 + $0x298] sm:$0xff]
    %v159 = vld [vmem:[#allocation6 + $0x2a0] sm:$0xff]
    %v160 = vld [vmem:[#allocation6 + $0x2a8] sm:$0xff]
    %v161 = vld [vmem:[#allocation6 + $0x2b0] sm:$0xff]
    %v162 = vld [vmem:[#allocation6 + $0x2b8] sm:$0xff]
    %v163 = vld [vmem:[#allocation6 + $0x2c0] sm:$0xff]
    %v164 = vld [vmem:[#allocation6 + $0x2c8] sm:$0xff]
    %v165 = vld [vmem:[#allocation6 + $0x2d0] sm:$0xff]
    %v166 = vld [vmem:[#allocation6 + $0x2d8] sm:$0xff]
    %v167 = vld [vmem:[#allocation6 + $0x2e0] sm:$0xff]
    %v168 = vld [vmem:[#allocation6 + $0x2e8] sm:$0xff]
    %v169 = vld [vmem:[#allocation6 + $0x2f0] sm:$0xff]
    %v170 = vld [vmem:[#allocation6 + $0x2f8] sm:$0xff]
    %v171 = vld [vmem:[#allocation6 + $0x300] sm:$0xff]
    %v172 = vld [vmem:[#allocation6 + $0x308] sm:$0xff]
    %v173 = vld [vmem:[#allocation6 + $0x310] sm:$0xff]
    %v174 = vld [vmem:[#allocation6 + $0x318] sm:$0xff]
    %v175 = vld [vmem:[#allocation6 + $0x320] sm:$0xff]
    %v176 = vld [vmem:[#allocation6 + $0x328] sm:$0xff]
    %v177 = vld [vmem:[#allocation6 + $0x330] sm:$0xff]
    %v178 = vld [vmem:[#allocation6 + $0x338] sm:$0xff]
    %v179 = vld [vmem:[#allocation6 + $0x340] sm:$0xff]
    %v180 = vld [vmem:[#allocation6 + $0x348] sm:$0xff]
    %v181 = vld [vmem:[#allocation6 + $0x350] sm:$0xff]
    %v182 = vld [vmem:[#allocation6 + $0x358] sm:$0xff]
    %v183 = vld [vmem:[#allocation6 + $0x360] sm:$0xff]
    %v184 = vld [vmem:[#allocation6 + $0x368] sm:$0xff]
    %v185 = vld [vmem:[#allocation6 + $0x370] sm:$0xff]
    %v186 = vld [vmem:[#allocation6 + $0x378] sm:$0xff]
    %v187 = vld [vmem:[#allocation6 + $0x380] sm:$0xff]
    %v188 = vld [vmem:[#allocation6 + $0x388] sm:$0xff]
    %v189 = vld [vmem:[#allocation6 + $0x390] sm:$0xff]
    %v190 = vld [vmem:[#allocation6 + $0x398] sm:$0xff]
    %v191 = vld [vmem:[#allocation6 + $0x3a0] sm:$0xff]
    %v192 = vld [vmem:[#allocation6 + $0x3a8] sm:$0xff]
    %v193 = vld [vmem:[#allocation6 + $0x3b0] sm:$0xff]
    %v194 = vld [vmem:[#allocation6 + $0x3b8] sm:$0xff]
    %v195 = vld [vmem:[#allocation6 + $0x3c0] sm:$0xff]
    %v196 = vld [vmem:[#allocation6 + $0x3c8] sm:$0xff]
    %v197 = vld [vmem:[#allocation6 + $0x3d0] sm:$0xff]
    %v198 = vld [vmem:[#allocation6 + $0x3d8] sm:$0xff]
    %v199 = vld [vmem:[#allocation6 + $0x3e0] sm:$0xff]
    %v200 = vld [vmem:[#allocation6 + $0x3e8] sm:$0xff]
    %v201 = vld [vmem:[#allocation6 + $0x3f0] sm:$0xff]
    %v202 = vld [vmem:[#allocation6 + $0x3f8] sm:$0xff]
    %v203 = vld [vmem:[#allocation6 + $0x400] sm:$0xff]
    %v204 = vld [vmem:[#allocation6 + $0x408] sm:$0xff]
    %v205 = vld [vmem:[#allocation6 + $0x410] sm:$0xff]
    %v206 = vld [vmem:[#allocation6 + $0x418] sm:$0xff]
    %v207 = vld [vmem:[#allocation6 + $0x420] sm:$0xff]
    %v208 = vld [vmem:[#allocation6 + $0x428] sm:$0xff]
    %v209 = vld [vmem:[#allocation6 + $0x430] sm:$0xff]
    %v210 = vld [vmem:[#allocation6 + $0x438] sm:$0xff]
    %v211 = vld [vmem:[#allocation6 + $0x440] sm:$0xff]
    %v212 = vld [vmem:[#allocation6 + $0x448] sm:$0xff]
    %v213 = vld [vmem:[#allocation6 + $0x450] sm:$0xff]
    %v214 = vld [vmem:[#allocation6 + $0x458] sm:$0xff]
    %v215 = vld [vmem:[#allocation6 + $0x460] sm:$0xff]
    %v216 = vld [vmem:[#allocation6 + $0x468] sm:$0xff]
    %v217 = vld [vmem:[#allocation6 + $0x470] sm:$0xff]
    %v218 = vld [vmem:[#allocation6 + $0x478] sm:$0xff]
    %v219 = vld [vmem:[#allocation6 + $0x480] sm:$0xff]
    %v220 = vld [vmem:[#allocation6 + $0x488] sm:$0xff]
    %v221 = vld [vmem:[#allocation6 + $0x490] sm:$0xff]
    %v222 = vld [vmem:[#allocation6 + $0x498] sm:$0xff]
    %v223 = vld [vmem:[#allocation6 + $0x4a0] sm:$0xff]
    %v224 = vld [vmem:[#allocation6 + $0x4a8] sm:$0xff]
    %v225 = vld [vmem:[#allocation6 + $0x4b0] sm:$0xff]
    %v226 = vld [vmem:[#allocation6 + $0x4b8] sm:$0xff]
    %v227 = vld [vmem:[#allocation6 + $0x4c0] sm:$0xff]
    %v228 = vld [vmem:[#allocation6 + $0x4c8] sm:$0xff]
    %v229 = vld [vmem:[#allocation6 + $0x4d0] sm:$0xff]
    %v230 = vld [vmem:[#allocation6 + $0x4d8] sm:$0xff]
    %v231 = vld [vmem:[#allocation6 + $0x4e0] sm:$0xff]
    %v232 = vld [vmem:[#allocation6 + $0x4e8] sm:$0xff]
    %v233 = vld [vmem:[#allocation6 + $0x4f0] sm:$0xff]
    %v234 = vld [vmem:[#allocation6 + $0x4f8] sm:$0xff]
    %v235 = vld [vmem:[#allocation6 + $0x500] sm:$0xff]
    %v236 = vld [vmem:[#allocation6 + $0x508] sm:$0xff]
    %v237 = vld [vmem:[#allocation6 + $0x510] sm:$0xff]
    %v238 = vld [vmem:[#allocation6 + $0x518] sm:$0xff]
    %v239 = vld [vmem:[#allocation6 + $0x520] sm:$0xff]
    %v240 = vld [vmem:[#allocation6 + $0x528] sm:$0xff]
    %v241 = vld [vmem:[#allocation6 + $0x530] sm:$0xff]
    %v242 = vld [vmem:[#allocation6 + $0x538] sm:$0xff]
    %v243 = vld [vmem:[#allocation6 + $0x540] sm:$0xff]
    %v244 = vld [vmem:[#allocation6 + $0x548] sm:$0xff]
    %v245 = vld [vmem:[#allocation6 + $0x550] sm:$0xff]
    %v246 = vld [vmem:[#allocation6 + $0x558] sm:$0xff]
    %v247 = vld [vmem:[#allocation6 + $0x560] sm:$0xff]
    %v248 = vld [vmem:[#allocation6 + $0x568] sm:$0xff]
    %v249 = vld [vmem:[#allocation6 + $0x570] sm:$0xff]
    %v250 = vld [vmem:[#allocation6 + $0x578] sm:$0xff]
    %v251 = vld [vmem:[#allocation6 + $0x580] sm:$0xff]
    %v252 = vld [vmem:[#allocation6 + $0x588] sm:$0xff]
    %v253 = vld [vmem:[#allocation6 + $0x590] sm:$0xff]
    %v254 = vld [vmem:[#allocation6 + $0x598] sm:$0xff]
    %v255 = vld [vmem:[#allocation6 + $0x5a0] sm:$0xff]
    %v256 = vld [vmem:[#allocation6 + $0x5a8] sm:$0xff]
    %v257 = vld [vmem:[#allocation6 + $0x5b0] sm:$0xff]
    %v258 = vld [vmem:[#allocation6 + $0x5b8] sm:$0xff]
    %v259 = vld [vmem:[#allocation6 + $0x5c0] sm:$0xff]
    %v260 = vld [vmem:[#allocation6 + $0x5c8] sm:$0xff]
    %v261 = vld [vmem:[#allocation6 + $0x5d0] sm:$0xff]
    %v262 = vld [vmem:[#allocation6 + $0x5d8] sm:$0xff]
    %v263 = vld [vmem:[#allocation6 + $0x5e0] sm:$0xff]
    %v264 = vld [vmem:[#allocation6 + $0x5e8] sm:$0xff]
    %v265 = vld [vmem:[#allocation6 + $0x5f0] sm:$0xff]
    %v266 = vld [vmem:[#allocation6 + $0x5f8] sm:$0xff]
    %v267 = vld [vmem:[%s2] sm:$0x1]
    %v269 = vlaneseq
    %v270 = vshrl.u32 %v269, 7
    %v271 = vsub.s32 0, %v270
    %v272 = vrot.slane %v267, %v271
    %274 = vmatprep.subr.mxu0 0.0
    %275 = vmatpush1.msra.mxu0 %v75
    %276 = vmatprep.subr.mxu0 0.0
    %277 = vmatpush1.msra.mxu0 %v76
    %278 = vmatprep.subr.mxu0 0.0
    %279 = vmatpush1.msra.mxu0 %v77
    %280 = vmatprep.subr.mxu0 0.0
    %281 = vmatpush1.msra.mxu0 %v78
    %282 = vmatprep.subr.mxu0 0.0
    %283 = vmatpush1.msra.mxu0 %v79
    %284 = vmatprep.subr.mxu0 0.0
    %285 = vmatpush1.msra.mxu0 %v80
    %286 = vmatprep.subr.mxu0 0.0
    %287 = vmatpush1.msra.mxu0 %v81
    %288 = vmatprep.subr.mxu0 0.0
    %289 = vmatpush1.msra.mxu0 %v82
    %290 = vmatprep.subr.mxu0 0.0
    %291 = vmatpush1.msra.mxu0 %v83
    %292 = vmatprep.subr.mxu0 0.0
    %293 = vmatpush1.msra.mxu0 %v84
    %294 = vmatprep.subr.mxu0 0.0
    %295 = vmatpush1.msra.mxu0 %v85
    %296 = vmatprep.subr.mxu0 0.0
    %297 = vmatpush1.msra.mxu0 %v86
    %298 = vmatprep.subr.mxu0 0.0
    %299 = vmatpush1.msra.mxu0 %v87
    %300 = vmatprep.subr.mxu0 0.0
    %301 = vmatpush1.msra.mxu0 %v88
    %302 = vmatprep.subr.mxu0 0.0
    %303 = vmatpush1.msra.mxu0 %v89
    %304 = vmatprep.subr.mxu0 0.0
    %305 = vmatpush1.msra.mxu0 %v90
    %306 = vmatprep.subr.mxu0 0.0
    %307 = vmatpush1.msra.mxu0 %v91
    %308 = vmatprep.subr.mxu0 0.0
    %309 = vmatpush1.msra.mxu0 %v92
    %310 = vmatprep.subr.mxu0 0.0
    %311 = vmatpush1.msra.mxu0 %v93
    %312 = vmatprep.subr.mxu0 0.0
    %313 = vmatpush1.msra.mxu0 %v94
    %314 = vmatprep.subr.mxu0 0.0
    %315 = vmatpush1.msra.mxu0 %v95
    %316 = vmatprep.subr.mxu0 0.0
    %317 = vmatpush1.msra.mxu0 %v96
    %318 = vmatprep.subr.mxu0 0.0
    %319 = vmatpush1.msra.mxu0 %v97
    %320 = vmatprep.subr.mxu0 0.0
    %321 = vmatpush1.msra.mxu0 %v98
    %322 = vmatprep.subr.mxu0 0.0
    %323 = vmatpush1.msra.mxu0 %v99
    %324 = vmatprep.subr.mxu0 0.0
    %325 = vmatpush1.msra.mxu0 %v100
    %326 = vmatprep.subr.mxu0 0.0
    %327 = vmatpush1.msra.mxu0 %v101
    %328 = vmatprep.subr.mxu0 0.0
    %329 = vmatpush1.msra.mxu0 %v102
    %330 = vmatprep.subr.mxu0 0.0
    %331 = vmatpush1.msra.mxu0 %v103
    %332 = vmatprep.subr.mxu0 0.0
    %333 = vmatpush1.msra.mxu0 %v104
    %334 = vmatprep.subr.mxu0 0.0
    %335 = vmatpush1.msra.mxu0 %v105
    %336 = vmatprep.subr.mxu0 0.0
    %337 = vmatpush1.msra.mxu0 %v106
    %338 = vmatprep.mubr.f32.mxu0 %v52
    %339 = vmatmul.mubr.f32.gmra.mrb[0].mxu0 %v51
    %v340 = vpop.f32.mrb[0].mxu0
    %v341 = vadd.f32 %v272, %v340
    %v342 = vpop.f32.mrb[0].mxu0
    %343 = vmatprep.mubr.f32.mxu0 %v64
    %344 = vmatmul.mubr.f32.gmra.mrb[0].mxu0 %v63
    %v345 = vpop.f32.mrb[0].mxu0
    %v346 = vadd.f32 %v272, %v345
    %v347 = vpop.f32.mrb[0].mxu0
    %348 = vdwg.mxu0
    %349 = vmatprep.subr.mxu0 0.0
    %350 = vmatpush1.msra.mxu0 %v107
    %351 = vmatprep.subr.mxu0 0.0
    %352 = vmatpush1.msra.mxu0 %v108
    %353 = vmatprep.subr.mxu0 0.0
    %354 = vmatpush1.msra.mxu0 %v109
    %355 = vmatprep.subr.mxu0 0.0
    %356 = vmatpush1.msra.mxu0 %v110
    %357 = vmatprep.subr.mxu0 0.0
    %358 = vmatpush1.msra.mxu0 %v111
    %359 = vmatprep.subr.mxu0 0.0
    %360 = vmatpush1.msra.mxu0 %v112
    %361 = vmatprep.subr.mxu0 0.0
    %362 = vmatpush1.msra.mxu0 %v113
    %363 = vmatprep.subr.mxu0 0.0
    %364 = vmatpush1.msra.mxu0 %v114
    %365 = vmatprep.subr.mxu0 0.0
    %366 = vmatpush1.msra.mxu0 %v115
    %367 = vmatprep.subr.mxu0 0.0
    %368 = vmatpush1.msra.mxu0 %v116
    %369 = vmatprep.subr.mxu0 0.0
    %370 = vmatpush1.msra.mxu0 %v117
    %371 = vmatprep.subr.mxu0 0.0
    %372 = vmatpush1.msra.mxu0 %v118
    %373 = vmatprep.subr.mxu0 0.0
    %374 = vmatpush1.msra.mxu0 %v119
    %375 = vmatprep.subr.mxu0 0.0
    %376 = vmatpush1.msra.mxu0 %v120
    %377 = vmatprep.subr.mxu0 0.0
    %378 = vmatpush1.msra.mxu0 %v121
    %379 = vmatprep.subr.mxu0 0.0
    %380 = vmatpush1.msra.mxu0 %v122
    %381 = vmatprep.subr.mxu0 0.0
    %382 = vmatpush1.msra.mxu0 %v123
    %383 = vmatprep.subr.mxu0 0.0
    %384 = vmatpush1.msra.mxu0 %v124
    %385 = vmatprep.subr.mxu0 0.0
    %386 = vmatpush1.msra.mxu0 %v125
    %387 = vmatprep.subr.mxu0 0.0
    %388 = vmatpush1.msra.mxu0 %v126
    %389 = vmatprep.subr.mxu0 0.0
    %390 = vmatpush1.msra.mxu0 %v127
    %391 = vmatprep.subr.mxu0 0.0
    %392 = vmatpush1.msra.mxu0 %v128
    %393 = vmatprep.subr.mxu0 0.0
    %394 = vmatpush1.msra.mxu0 %v129
    %395 = vmatprep.subr.mxu0 0.0
    %396 = vmatpush1.msra.mxu0 %v130
    %397 = vmatprep.subr.mxu0 0.0
    %398 = vmatpush1.msra.mxu0 %v131
    %399 = vmatprep.subr.mxu0 0.0
    %400 = vmatpush1.msra.mxu0 %v132
    %401 = vmatprep.subr.mxu0 0.0
    %402 = vmatpush1.msra.mxu0 %v133
    %403 = vmatprep.subr.mxu0 0.0
    %404 = vmatpush1.msra.mxu0 %v134
    %405 = vmatprep.subr.mxu0 0.0
    %406 = vmatpush1.msra.mxu0 %v135
    %407 = vmatprep.subr.mxu0 0.0
    %408 = vmatpush1.msra.mxu0 %v136
    %409 = vmatprep.subr.mxu0 0.0
    %410 = vmatpush1.msra.mxu0 %v137
    %411 = vmatprep.subr.mxu0 0.0
    %412 = vmatpush1.msra.mxu0 %v138
    %413 = vmatprep.mubr.f32.mxu0 %v54
    %414 = vmatmul.mubr.f32.gmra.mrb[0].mxu0 %v53
    %v415 = vpop.f32.mrb[0].mxu0
    %v416 = vadd.f32 %v341, %v415
    %v417 = vpop.f32.mrb[0].mxu0
    %418 = vmatprep.mubr.f32.mxu0 %v66
    %419 = vmatmul.mubr.f32.gmra.mrb[0].mxu0 %v65
    %v420 = vpop.f32.mrb[0].mxu0
    %v421 = vadd.f32 %v346, %v420
    %v422 = vpop.f32.mrb[0].mxu0
    %423 = vdwg.mxu0
    %424 = vmatprep.subr.mxu0 0.0
    %425 = vmatpush1.msra.mxu0 %v139
    %426 = vmatprep.subr.mxu0 0.0
    %427 = vmatpush1.msra.mxu0 %v140
    %428 = vmatprep.subr.mxu0 0.0
    %429 = vmatpush1.msra.mxu0 %v141
    %430 = vmatprep.subr.mxu0 0.0
    %431 = vmatpush1.msra.mxu0 %v142
    %432 = vmatprep.subr.mxu0 0.0
    %433 = vmatpush1.msra.mxu0 %v143
    %434 = vmatprep.subr.mxu0 0.0
    %435 = vmatpush1.msra.mxu0 %v144
    %436 = vmatprep.subr.mxu0 0.0
    %437 = vmatpush1.msra.mxu0 %v145
    %438 = vmatprep.subr.mxu0 0.0
    %439 = vmatpush1.msra.mxu0 %v146
    %440 = vmatprep.subr.mxu0 0.0
    %441 = vmatpush1.msra.mxu0 %v147
    %442 = vmatprep.subr.mxu0 0.0
    %443 = vmatpush1.msra.mxu0 %v148
    %444 = vmatprep.subr.mxu0 0.0
    %445 = vmatpush1.msra.mxu0 %v149
    %446 = vmatprep.subr.mxu0 0.0
    %447 = vmatpush1.msra.mxu0 %v150
    %448 = vmatprep.subr.mxu0 0.0
    %449 = vmatpush1.msra.mxu0 %v151
    %450 = vmatprep.subr.mxu0 0.0
    %451 = vmatpush1.msra.mxu0 %v152
    %452 = vmatprep.subr.mxu0 0.0
    %453 = vmatpush1.msra.mxu0 %v153
    %454 = vmatprep.subr.mxu0 0.0
    %455 = vmatpush1.msra.mxu0 %v154
    %456 = vmatprep.subr.mxu0 0.0
    %457 = vmatpush1.msra.mxu0 %v155
    %458 = vmatprep.subr.mxu0 0.0
    %459 = vmatpush1.msra.mxu0 %v156
    %460 = vmatprep.subr.mxu0 0.0
    %461 = vmatpush1.msra.mxu0 %v157
    %462 = vmatprep.subr.mxu0 0.0
    %463 = vmatpush1.msra.mxu0 %v158
    %464 = vmatprep.subr.mxu0 0.0
    %465 = vmatpush1.msra.mxu0 %v159
    %466 = vmatprep.subr.mxu0 0.0
    %467 = vmatpush1.msra.mxu0 %v160
    %468 = vmatprep.subr.mxu0 0.0
    %469 = vmatpush1.msra.mxu0 %v161
    %470 = vmatprep.subr.mxu0 0.0
    %471 = vmatpush1.msra.mxu0 %v162
    %472 = vmatprep.subr.mxu0 0.0
    %473 = vmatpush1.msra.mxu0 %v163
    %474 = vmatprep.subr.mxu0 0.0
    %475 = vmatpush1.msra.mxu0 %v164
    %476 = vmatprep.subr.mxu0 0.0
    %477 = vmatpush1.msra.mxu0 %v165
    %478 = vmatprep.subr.mxu0 0.0
    %479 = vmatpush1.msra.mxu0 %v166
    %480 = vmatprep.subr.mxu0 0.0
    %481 = vmatpush1.msra.mxu0 %v167
    %482 = vmatprep.subr.mxu0 0.0
    %483 = vmatpush1.msra.mxu0 %v168
    %484 = vmatprep.subr.mxu0 0.0
    %485 = vmatpush1.msra.mxu0 %v169
    %486 = vmatprep.subr.mxu0 0.0
    %487 = vmatpush1.msra.mxu0 %v170
    %488 = vmatprep.mubr.f32.mxu0 %v56
    %489 = vmatmul.mubr.f32.gmra.mrb[0].mxu0 %v55
    %v490 = vpop.f32.mrb[0].mxu0
    %v491 = vadd.f32 %v416, %v490
    %v492 = vpop.f32.mrb[0].mxu0
    %493 = vmatprep.mubr.f32.mxu0 %v68
    %494 = vmatmul.mubr.f32.gmra.mrb[0].mxu0 %v67
    %v495 = vpop.f32.mrb[0].mxu0
    %v496 = vadd.f32 %v421, %v495
    %v497 = vpop.f32.mrb[0].mxu0
    %498 = vdwg.mxu0
    %499 = vmatprep.subr.mxu0 0.0
    %500 = vmatpush1.msra.mxu0 %v171
    %501 = vmatprep.subr.mxu0 0.0
    %502 = vmatpush1.msra.mxu0 %v172
    %503 = vmatprep.subr.mxu0 0.0
    %504 = vmatpush1.msra.mxu0 %v173
    %505 = vmatprep.subr.mxu0 0.0
    %506 = vmatpush1.msra.mxu0 %v174
    %507 = vmatprep.subr.mxu0 0.0
    %508 = vmatpush1.msra.mxu0 %v175
    %509 = vmatprep.subr.mxu0 0.0
    %510 = vmatpush1.msra.mxu0 %v176
    %511 = vmatprep.subr.mxu0 0.0
    %512 = vmatpush1.msra.mxu0 %v177
    %513 = vmatprep.subr.mxu0 0.0
    %514 = vmatpush1.msra.mxu0 %v178
    %515 = vmatprep.subr.mxu0 0.0
    %516 = vmatpush1.msra.mxu0 %v179
    %517 = vmatprep.subr.mxu0 0.0
    %518 = vmatpush1.msra.mxu0 %v180
    %519 = vmatprep.subr.mxu0 0.0
    %520 = vmatpush1.msra.mxu0 %v181
    %521 = vmatprep.subr.mxu0 0.0
    %522 = vmatpush1.msra.mxu0 %v182
    %523 = vmatprep.subr.mxu0 0.0
    %524 = vmatpush1.msra.mxu0 %v183
    %525 = vmatprep.subr.mxu0 0.0
    %526 = vmatpush1.msra.mxu0 %v184
    %527 = vmatprep.subr.mxu0 0.0
    %528 = vmatpush1.msra.mxu0 %v185
    %529 = vmatprep.subr.mxu0 0.0
    %530 = vmatpush1.msra.mxu0 %v186
    %531 = vmatprep.subr.mxu0 0.0
    %532 = vmatpush1.msra.mxu0 %v187
    %533 = vmatprep.subr.mxu0 0.0
    %534 = vmatpush1.msra.mxu0 %v188
    %535 = vmatprep.subr.mxu0 0.0
    %536 = vmatpush1.msra.mxu0 %v189
    %537 = vmatprep.subr.mxu0 0.0
    %538 = vmatpush1.msra.mxu0 %v190
    %539 = vmatprep.subr.mxu0 0.0
    %540 = vmatpush1.msra.mxu0 %v191
    %541 = vmatprep.subr.mxu0 0.0
    %542 = vmatpush1.msra.mxu0 %v192
    %543 = vmatprep.subr.mxu0 0.0
    %544 = vmatpush1.msra.mxu0 %v193
    %545 = vmatprep.subr.mxu0 0.0
    %546 = vmatpush1.msra.mxu0 %v194
    %547 = vmatprep.subr.mxu0 0.0
    %548 = vmatpush1.msra.mxu0 %v195
    %549 = vmatprep.subr.mxu0 0.0
    %550 = vmatpush1.msra.mxu0 %v196
    %551 = vmatprep.subr.mxu0 0.0
    %552 = vmatpush1.msra.mxu0 %v197
    %553 = vmatprep.subr.mxu0 0.0
    %554 = vmatpush1.msra.mxu0 %v198
    %555 = vmatprep.subr.mxu0 0.0
    %556 = vmatpush1.msra.mxu0 %v199
    %557 = vmatprep.subr.mxu0 0.0
    %558 = vmatpush1.msra.mxu0 %v200
    %559 = vmatprep.subr.mxu0 0.0
    %560 = vmatpush1.msra.mxu0 %v201
    %561 = vmatprep.subr.mxu0 0.0
    %562 = vmatpush1.msra.mxu0 %v202
    %563 = vmatprep.mubr.f32.mxu0 %v58
    %564 = vmatmul.mubr.f32.gmra.mrb[0].mxu0 %v57
    %v565 = vpop.f32.mrb[0].mxu0
    %v566 = vadd.f32 %v491, %v565
    %v567 = vpop.f32.mrb[0].mxu0
    %568 = vmatprep.mubr.f32.mxu0 %v70
    %569 = vmatmul.mubr.f32.gmra.mrb[0].mxu0 %v69
    %v570 = vpop.f32.mrb[0].mxu0
    %v571 = vadd.f32 %v496, %v570
    %v572 = vpop.f32.mrb[0].mxu0
    %573 = vdwg.mxu0
    %574 = vmatprep.subr.mxu0 0.0
    %575 = vmatpush1.msra.mxu0 %v203
    %576 = vmatprep.subr.mxu0 0.0
    %577 = vmatpush1.msra.mxu0 %v204
    %578 = vmatprep.subr.mxu0 0.0
    %579 = vmatpush1.msra.mxu0 %v205
    %580 = vmatprep.subr.mxu0 0.0
    %581 = vmatpush1.msra.mxu0 %v206
    %582 = vmatprep.subr.mxu0 0.0
    %583 = vmatpush1.msra.mxu0 %v207
    %584 = vmatprep.subr.mxu0 0.0
    %585 = vmatpush1.msra.mxu0 %v208
    %586 = vmatprep.subr.mxu0 0.0
    %587 = vmatpush1.msra.mxu0 %v209
    %588 = vmatprep.subr.mxu0 0.0
    %589 = vmatpush1.msra.mxu0 %v210
    %590 = vmatprep.subr.mxu0 0.0
    %591 = vmatpush1.msra.mxu0 %v211
    %592 = vmatprep.subr.mxu0 0.0
    %593 = vmatpush1.msra.mxu0 %v212
    %594 = vmatprep.subr.mxu0 0.0
    %595 = vmatpush1.msra.mxu0 %v213
    %596 = vmatprep.subr.mxu0 0.0
    %597 = vmatpush1.msra.mxu0 %v214
    %598 = vmatprep.subr.mxu0 0.0
    %599 = vmatpush1.msra.mxu0 %v215
    %600 = vmatprep.subr.mxu0 0.0
    %601 = vmatpush1.msra.mxu0 %v216
    %602 = vmatprep.subr.mxu0 0.0
    %603 = vmatpush1.msra.mxu0 %v217
    %604 = vmatprep.subr.mxu0 0.0
    %605 = vmatpush1.msra.mxu0 %v218
    %606 = vmatprep.subr.mxu0 0.0
    %607 = vmatpush1.msra.mxu0 %v219
    %608 = vmatprep.subr.mxu0 0.0
    %609 = vmatpush1.msra.mxu0 %v220
    %610 = vmatprep.subr.mxu0 0.0
    %611 = vmatpush1.msra.mxu0 %v221
    %612 = vmatprep.subr.mxu0 0.0
    %613 = vmatpush1.msra.mxu0 %v222
    %614 = vmatprep.subr.mxu0 0.0
    %615 = vmatpush1.msra.mxu0 %v223
    %616 = vmatprep.subr.mxu0 0.0
    %617 = vmatpush1.msra.mxu0 %v224
    %618 = vmatprep.subr.mxu0 0.0
    %619 = vmatpush1.msra.mxu0 %v225
    %620 = vmatprep.subr.mxu0 0.0
    %621 = vmatpush1.msra.mxu0 %v226
    %622 = vmatprep.subr.mxu0 0.0
    %623 = vmatpush1.msra.mxu0 %v227
    %624 = vmatprep.subr.mxu0 0.0
    %625 = vmatpush1.msra.mxu0 %v228
    %626 = vmatprep.subr.mxu0 0.0
    %627 = vmatpush1.msra.mxu0 %v229
    %628 = vmatprep.subr.mxu0 0.0
    %629 = vmatpush1.msra.mxu0 %v230
    %630 = vmatprep.subr.mxu0 0.0
    %631 = vmatpush1.msra.mxu0 %v231
    %632 = vmatprep.subr.mxu0 0.0
    %633 = vmatpush1.msra.mxu0 %v232
    %634 = vmatprep.subr.mxu0 0.0
    %635 = vmatpush1.msra.mxu0 %v233
    %636 = vmatprep.subr.mxu0 0.0
    %637 = vmatpush1.msra.mxu0 %v234
    %638 = vmatprep.mubr.f32.mxu0 %v60
    %639 = vmatmul.mubr.f32.gmra.mrb[0].mxu0 %v59
    %v640 = vpop.f32.mrb[0].mxu0
    %v641 = vadd.f32 %v566, %v640
    %v642 = vpop.f32.mrb[0].mxu0
    %643 = vmatprep.mubr.f32.mxu0 %v72
    %644 = vmatmul.mubr.f32.gmra.mrb[0].mxu0 %v71
    %v645 = vpop.f32.mrb[0].mxu0
    %v646 = vadd.f32 %v571, %v645
    %v647 = vpop.f32.mrb[0].mxu0
    %648 = vdwg.mxu0
    %649 = vmatprep.subr.mxu0 0.0
    %650 = vmatpush1.msra.mxu0 %v235
    %651 = vmatprep.subr.mxu0 0.0
    %652 = vmatpush1.msra.mxu0 %v236
    %653 = vmatprep.subr.mxu0 0.0
    %654 = vmatpush1.msra.mxu0 %v237
    %655 = vmatprep.subr.mxu0 0.0
    %656 = vmatpush1.msra.mxu0 %v238
    %657 = vmatprep.subr.mxu0 0.0
    %658 = vmatpush1.msra.mxu0 %v239
    %659 = vmatprep.subr.mxu0 0.0
    %660 = vmatpush1.msra.mxu0 %v240
    %661 = vmatprep.subr.mxu0 0.0
    %662 = vmatpush1.msra.mxu0 %v241
    %663 = vmatprep.subr.mxu0 0.0
    %664 = vmatpush1.msra.mxu0 %v242
    %665 = vmatprep.subr.mxu0 0.0
    %666 = vmatpush1.msra.mxu0 %v243
    %667 = vmatprep.subr.mxu0 0.0
    %668 = vmatpush1.msra.mxu0 %v244
    %669 = vmatprep.subr.mxu0 0.0
    %670 = vmatpush1.msra.mxu0 %v245
    %671 = vmatprep.subr.mxu0 0.0
    %672 = vmatpush1.msra.mxu0 %v246
    %673 = vmatprep.subr.mxu0 0.0
    %674 = vmatpush1.msra.mxu0 %v247
    %675 = vmatprep.subr.mxu0 0.0
    %676 = vmatpush1.msra.mxu0 %v248
    %677 = vmatprep.subr.mxu0 0.0
    %678 = vmatpush1.msra.mxu0 %v249
    %679 = vmatprep.subr.mxu0 0.0
    %680 = vmatpush1.msra.mxu0 %v250
    %681 = vmatprep.subr.mxu0 0.0
    %682 = vmatpush1.msra.mxu0 %v251
    %683 = vmatprep.subr.mxu0 0.0
    %684 = vmatpush1.msra.mxu0 %v252
    %685 = vmatprep.subr.mxu0 0.0
    %686 = vmatpush1.msra.mxu0 %v253
    %687 = vmatprep.subr.mxu0 0.0
    %688 = vmatpush1.msra.mxu0 %v254
    %689 = vmatprep.subr.mxu0 0.0
    %690 = vmatpush1.msra.mxu0 %v255
    %691 = vmatprep.subr.mxu0 0.0
    %692 = vmatpush1.msra.mxu0 %v256
    %693 = vmatprep.subr.mxu0 0.0
    %694 = vmatpush1.msra.mxu0 %v257
    %695 = vmatprep.subr.mxu0 0.0
    %696 = vmatpush1.msra.mxu0 %v258
    %697 = vmatprep.subr.mxu0 0.0
    %698 = vmatpush1.msra.mxu0 %v259
    %699 = vmatprep.subr.mxu0 0.0
    %700 = vmatpush1.msra.mxu0 %v260
    %701 = vmatprep.subr.mxu0 0.0
    %702 = vmatpush1.msra.mxu0 %v261
    %703 = vmatprep.subr.mxu0 0.0
    %704 = vmatpush1.msra.mxu0 %v262
    %705 = vmatprep.subr.mxu0 0.0
    %706 = vmatpush1.msra.mxu0 %v263
    %707 = vmatprep.subr.mxu0 0.0
    %708 = vmatpush1.msra.mxu0 %v264
    %709 = vmatprep.subr.mxu0 0.0
    %710 = vmatpush1.msra.mxu0 %v265
    %711 = vmatprep.subr.mxu0 0.0
    %712 = vmatpush1.msra.mxu0 %v266
    %713 = vmatprep.mubr.f32.mxu0 %v62
    %714 = vmatmul.mubr.f32.gmra.mrb[0].mxu0 %v61
    %v715 = vpop.f32.mrb[0].mxu0
    %v716 = vadd.f32 %v641, %v715
    %v717 = vpop.f32.mrb[0].mxu0
    %718 = vmatprep.mubr.f32.mxu0 %v74
    %719 = vmatmul.mubr.f32.gmra.mrb[0].mxu0 %v73
    %v720 = vpop.f32.mrb[0].mxu0
    %v721 = vadd.f32 %v646, %v720
    %v722 = vpop.f32.mrb[0].mxu0
    %723 = vdwg.mxu0
    %v724 = vmax.f32 %v716, 0.0
    %v725 = vmax.f32 %v721, 0.0
    %v726 = vld [vmem:[%s3] sm:$0x1]
    %v728 = vlaneseq
    %v729 = vshrl.u32 %v728, 7
    %v730 = vsub.s32 0, %v729
    %v731 = vrot.slane %v726, %v730
    %v733 = vmul.f32 %v724, %v731
    %v734 = vmul.f32 %v725, %v731
    %735 = vadd.xlane.f32.xlu0 %v733
    %v736 = vpop.xlane.xlu0 %735
    %737 = vadd.xlane.f32.xlu0 %v734
    %v738 = vpop.xlane.xlu0 %737
    %v739 = vld [vmem:[#allocation2] sm:$0x1]
    %v741 = vlaneseq
    %v742 = vshrl.u32 %v741, 7
    %v743 = vsub.s32 0, %v742
    %v744 = vrot.slane %v739, %v743
    %v746 = vadd.f32 %v736, %v744
    %v747 = vadd.f32 %v738, %v744
    %v748 = vxor.u32 %v746, 2147483648
    %v749 = vxor.u32 %v747, 2147483648
    %v750 = vmul.f32 %v748, 1.442695
    %v751 = vpow.pop %v750
    %v752 = vmul.f32 %v749, 1.442695
    %v753 = vpow.pop %v752
    %v754 = vadd.f32 %v751, 1.0
    %v755 = vadd.f32 %v753, 1.0
    %v756 = vrcp.pop %v754
    %v757 = vmul.f32 1.0, %v756
    %v758 = vrcp.pop %v755
    %v759 = vmul.f32 1.0, %v758
    %761 = vset.pattern.permute.xlu0 0
    %762 = vperm.xlu0 %761, %v757
    %v763 = vpop.permute.xlu0 %762
    %766 = vset.pattern.permute.xlu0 0
    %767 = vperm.xlu0 %766, %v759
    %v768 = vpop.permute.xlu0 %767
    %770 = vst [vmem:[#allocation8] sm:$0xff] %v763
    %771 = vst [vmem:[#allocation8 + $0x8] sm:$0xff] %v768
    // Predicated region
    $region30: #{tpu_custom_call.1} parent=1 // pred_check
      _
    $region31: #{tpu_custom_call.1} parent=1 // pred_check_branch
      %773 = sbr.rel (0) target = $region33
    $region32: #{tpu_custom_call.1} parent=1 // pred_region
      %s775 = ssub.s32 256, 256
      %776 = vsyncadd [#allocation5], %s775
      %s777 = sshll.u32 [#allocation8], 4
      %s778 = int_to_ptr.vmem [resolvable:$true] %s777
      %783 = dma.vmem_to_hbm [thread:$0]  %s778, 256, %s5, [#allocation5], 128, 128, 8
    $region33: #{tpu_custom_call.1} parent=1 // pred_fallthru
      _
    // Predicated region
    $region34: #{tpu_custom_call.1} parent=1 // pred_check
      _
    $region35: #{tpu_custom_call.1} parent=1 // pred_check_branch
      %785 = sbr.rel (0) target = $region37
    $region36: #{tpu_custom_call.1} parent=1 // pred_region
      %786 = dma.done [#allocation5], 256
    $region37: #{tpu_custom_call.1} parent=1 // pred_fallthru
      _
    %787 = vsyncpa [#allocation4], 1
    %788 = vsyncpa [#allocation7], 1
    %789 = vsyncpa [#allocation5], 1

</llo_original>
